<compile_context>
chip_gen: v5e
topology: v5e:2x2
jax: 0.10.0
libtpu: 0.0.40
codegen_flags: <defaults>
</compile_context>

<pallas_src>
import functools

import jax
import jax.numpy as jnp
from jax.experimental import pallas as pl
from jax.experimental.pallas import tpu as pltpu


def _model_kernel(task_ref, *refs, q: float, apply_dropout: bool):
    """task_ref is the scalar-prefetch ref; remaining refs depend on dropout."""
    if apply_dropout:
        u_ref, x_ref, wt_ref, b_ref, a_ref, o_ref = refs
    else:
        x_ref, wt_ref, b_ref, a_ref, o_ref = refs

    x = x_ref[...].astype(jnp.float32)

    if apply_dropout:
        # Inverted dropout: mask-select only; the 1/(1-q) scale is folded into
        # the (pre-transposed) weight in the wrapper.
        keep = u_ref[...] >= q
        x = jnp.where(keep, x, jnp.zeros_like(x))

    # h = dropout(x) @ W_t + b   (W_t is (d, M): no in-kernel transpose)
    h = jnp.dot(x, wt_ref[...].astype(jnp.float32),
                preferred_element_type=jnp.float32) + b_ref[...]

    # out = h @ A[task]
    out = jnp.dot(h, a_ref[...].astype(jnp.float32),
                  preferred_element_type=jnp.float32)
    o_ref[...] = out.astype(o_ref.dtype)


def _pick_batch_tile(B: int) -> int:
    # Largest batch tile (multiple of 8) that divides B; else take the full batch.
    for tb in (512, 256, 128, 64, 32, 16, 8):
        if B % tb == 0:
            return tb
    return B


def model_forward(x, task, W, b, A, *, q: float, training: bool = True,
                  rng_key=None):
    """x: (B, d) f32, task: python int, W: (M, d), b: (M,), A: (T, M, K)."""
    B, d = x.shape
    T, M, K = A.shape
    assert W.shape == (M, d) and b.shape == (M,)

    task = int(task)
    assert 0 <= task < T, f"task {task} out of range [0, {T})"

    q = float(q)
    assert 0.0 <= q <= 1.0, "dropout probability must be in [0, 1]"
    apply_dropout = training and q > 0.0

    # Fold the dropout scale into the weight (once, outside the kernel), and
    # pre-transpose to (d, M) so the MXU contracts d directly.
    scale = 1.0 / (1.0 - q) if (apply_dropout and q < 1.0) else 1.0
    Wt = (W * jnp.float32(scale)).T            # (d, M)
    b2d = b.reshape(1, M)

    TB = _pick_batch_tile(B)
    grid = (B // TB,)

    task_arr = jnp.asarray([task], dtype=jnp.int32)

    inputs = [task_arr]
    in_specs = []
    if apply_dropout:
        if rng_key is None:
            rng_key = jax.random.PRNGKey(0)
        # NOTE: caller should vary rng_key per training step so masks differ.
        u = jax.random.uniform(rng_key, (B, d), dtype=jnp.float32)
        inputs.append(u)
        in_specs.append(pl.BlockSpec((TB, d), lambda i, t: (i, 0)))

    inputs += [x, Wt, b2d, A]
    in_specs += [
        pl.BlockSpec((TB, d), lambda i, t: (i, 0)),
        pl.BlockSpec((d, M), lambda i, t: (0, 0)),
        pl.BlockSpec((1, M), lambda i, t: (0, 0)),
        # A[task] selected via scalar prefetch; leading dim squeezed.
        pl.BlockSpec((None, M, K), lambda i, t: (t[0], 0, 0)),
    ]
    out_spec = pl.BlockSpec((TB, K), lambda i, t: (i, 0))

    kernel = functools.partial(_model_kernel, q=q, apply_dropout=apply_dropout)

    grid_spec = pltpu.PrefetchScalarGridSpec(
        num_scalar_prefetch=1,      # task -> SMEM, visible to index_maps
        grid=grid,
        in_specs=in_specs,
        out_specs=out_spec,
    )

    return pl.pallas_call(
        kernel,
        out_shape=jax.ShapeDtypeStruct((B, K), x.dtype),
        grid_spec=grid_spec,
        compiler_params=pltpu.CompilerParams(
            dimension_semantics=("parallel",)),
    )(*inputs)


if __name__ == "__main__":
    # Small shapes consistent with the module: batch=8, d=32, M=64, K=16, T=3.
    B, d, M, K, T = 8, 32, 64, 16, 3
    q = 0.1

    key = jax.random.PRNGKey(0)
    kx, kw, kb, ka, kd = jax.random.split(key, 5)

    x = jax.random.normal(kx, (B, d), dtype=jnp.float32)
    # nn.Linear default init: U(-1/sqrt(d), 1/sqrt(d)) for weight and bias.
    bound = 1.0 / (d ** 0.5)
    W = jax.random.uniform(kw, (M, d), minval=-bound, maxval=bound,
                           dtype=jnp.float32)
    b = jax.random.uniform(kb, (M,), minval=-bound, maxval=bound,
                           dtype=jnp.float32)
    A = jax.random.normal(ka, (T, M, K), dtype=jnp.float32)

    task = 1

    # Training-mode call (dropout active).
    out_train = model_forward(x, task, W, b, A, q=q, training=True, rng_key=kd)
    jax.block_until_ready(out_train)
    assert out_train.shape == (B, K) and out_train.dtype == jnp.float32

    # Eval-mode call (deterministic) checked against a pure-JAX reference.
    out_eval = model_forward(x, task, W, b, A, q=q, training=False)
    jax.block_until_ready(out_eval)
    ref = (x @ W.T + b) @ A[task]
    assert out_eval.shape == (B, K)
    assert jnp.allclose(out_eval, ref, atol=1e-4, rtol=1e-4)

    print("KERNEL_OK")
</pallas_src>

<mosaic_0001>
module attributes {stable_mosaic.version = 11 : i64} {
  func.func @_model_kernel(%arg0: i32, %arg1: memref<1xi32, #tpu.memory_space<smem>>, %arg2: memref<8x32xf32, #tpu.memory_space<vmem>>, %arg3: memref<8x32xf32, #tpu.memory_space<vmem>>, %arg4: memref<32x64xf32, #tpu.memory_space<vmem>>, %arg5: memref<1x64xf32, #tpu.memory_space<vmem>>, %arg6: memref<1x64x16xf32, #tpu.memory_space<vmem>>, %arg7: memref<8x16xf32, #tpu.memory_space<vmem>>) attributes {dimension_semantics = [#tpu.dimension_semantics<parallel>], iteration_bounds = array<i64: 1>, scalar_prefetch = 1 : i64, scratch_operands = 0 : i64, tpu.core_type = #tpu.core_type<tc>, window_params = [{transform_indices = @transform_0, window_bounds = array<i64: 8, 32>}, {transform_indices = @transform_1, window_bounds = array<i64: 8, 32>}, {pipeline_mode = #tpu.pipeline_mode<synchronous>, transform_indices = @transform_2, window_bounds = array<i64: 32, 64>}, {pipeline_mode = #tpu.pipeline_mode<synchronous>, transform_indices = @transform_3, window_bounds = array<i64: 1, 64>}, {transform_indices = @transform_4, window_bounds = array<i64: 1, 64, 16>}, {transform_indices = @transform_5, window_bounds = array<i64: 8, 16>}]} {
    %c0 = arith.constant 0 : index
    %c0_0 = arith.constant 0 : index
    %0 = vector.load %arg3[%c0, %c0_0] : memref<8x32xf32, #tpu.memory_space<vmem>>, vector<8x32xf32>
    %c0_1 = arith.constant 0 : index
    %c0_2 = arith.constant 0 : index
    %1 = vector.load %arg2[%c0_1, %c0_2] : memref<8x32xf32, #tpu.memory_space<vmem>>, vector<8x32xf32>
    %cst = arith.constant 1.000000e-01 : f32
    %2 = vector.broadcast %cst : f32 to vector<8x32xf32>
    %3 = arith.cmpf oge, %1, %2 : vector<8x32xf32>
    %cst_3 = arith.constant 0.000000e+00 : f32
    %4 = vector.broadcast %cst_3 : f32 to vector<8x32xf32>
    %5 = arith.select %3, %0, %4 : vector<8x32xi1>, vector<8x32xf32>
    %c0_4 = arith.constant 0 : index
    %c0_5 = arith.constant 0 : index
    %6 = vector.load %arg4[%c0_4, %c0_5] : memref<32x64xf32, #tpu.memory_space<vmem>>, vector<32x64xf32>
    %cst_6 = arith.constant dense<0.000000e+00> : vector<8x64xf32>
    %7 = tpu.matmul %5, %6, %cst_6 {dimension_numbers = #tpu.dot_dimension_numbers<[1], [0], [0], [1], [0, 0, 1, 1], [], []>} : vector<8x32xf32>, vector<32x64xf32>, vector<8x64xf32> -> vector<8x64xf32>
    %c0_7 = arith.constant 0 : index
    %c0_8 = arith.constant 0 : index
    %8 = vector.load %arg5[%c0_7, %c0_8] : memref<1x64xf32, #tpu.memory_space<vmem>>, vector<1x64xf32>
    %9 = vector.broadcast %8 : vector<1x64xf32> to vector<8x64xf32>
    %10 = arith.addf %7, %9 : vector<8x64xf32>
    %c0_9 = arith.constant 0 : index
    %c0_10 = arith.constant 0 : index
    %c0_11 = arith.constant 0 : index
    %11 = vector.load %arg6[%c0_9, %c0_10, %c0_11] : memref<1x64x16xf32, #tpu.memory_space<vmem>>, vector<1x64x16xf32>
    %12 = vector.shape_cast %11 : vector<1x64x16xf32> to vector<64x16xf32>
    %cst_12 = arith.constant dense<0.000000e+00> : vector<8x16xf32>
    %13 = tpu.matmul %10, %12, %cst_12 {dimension_numbers = #tpu.dot_dimension_numbers<[1], [0], [0], [1], [0, 0, 1, 1], [], []>} : vector<8x64xf32>, vector<64x16xf32>, vector<8x16xf32> -> vector<8x16xf32>
    %c0_13 = arith.constant 0 : index
    %c0_14 = arith.constant 0 : index
    %14 = vector.load %arg7[%c0_13, %c0_14] : memref<8x16xf32, #tpu.memory_space<vmem>>, vector<8x16xf32>
    tpu.vector_store %arg7[%c0_13, %c0_14], %13 {strides = array<i32>} : memref<8x16xf32, #tpu.memory_space<vmem>>, vector<8x16xf32>,
    return
  }
  func.func @transform_0(%arg0: i32, %arg1: memref<1xi32, #tpu.memory_space<smem>>) -> (i32, i32) {
    %c0_i32 = arith.constant 0 : i32
    %c0_i32_0 = arith.constant 0 : i32
    return %arg0, %c0_i32 : i32, i32
  }
  func.func @transform_1(%arg0: i32, %arg1: memref<1xi32, #tpu.memory_space<smem>>) -> (i32, i32) {
    %c0_i32 = arith.constant 0 : i32
    %c0_i32_0 = arith.constant 0 : i32
    return %arg0, %c0_i32 : i32, i32
  }
  func.func @transform_2(%arg0: i32, %arg1: memref<1xi32, #tpu.memory_space<smem>>) -> (i32, i32) {
    %c0_i32 = arith.constant 0 : i32
    %c0_i32_0 = arith.constant 0 : i32
    %c0_i32_1 = arith.constant 0 : i32
    return %c0_i32, %c0_i32_0 : i32, i32
  }
  func.func @transform_3(%arg0: i32, %arg1: memref<1xi32, #tpu.memory_space<smem>>) -> (i32, i32) {
    %c0_i32 = arith.constant 0 : i32
    %c0_i32_0 = arith.constant 0 : i32
    %c0_i32_1 = arith.constant 0 : i32
    return %c0_i32, %c0_i32_0 : i32, i32
  }
  func.func @transform_4(%arg0: i32, %arg1: memref<1xi32, #tpu.memory_space<smem>>) -> (i32, i32, i32) {
    %c0 = arith.constant 0 : index
    %0 = memref.load %arg1[%c0] : memref<1xi32, #tpu.memory_space<smem>>
    %c0_i32 = arith.constant 0 : i32
    %c0_i32_0 = arith.constant 0 : i32
    %c0_i32_1 = arith.constant 0 : i32
    return %0, %c0_i32, %c0_i32_0 : i32, i32, i32
  }
  func.func @transform_5(%arg0: i32, %arg1: memref<1xi32, #tpu.memory_space<smem>>) -> (i32, i32) {
    %c0_i32 = arith.constant 0 : i32
    %c0_i32_0 = arith.constant 0 : i32
    return %arg0, %c0_i32 : i32, i32
  }
}

</mosaic_0001>

<llo_original>
// kernel: tpu_custom_call.1
$region0: #{tpu_custom_call.1}
  #allocation0 [shape = 'u32[]', space=smem, size = 0x4, offset = 0x4, fixed_abs, tag = 'smem constant byte address 0x4 - core index']
  #allocation1 [shape = 'u32[72,128]{1,0:T(1,128)}', space=vmem, size = 0x9000, scoped, tag = 'internal scratch']
  #allocation2 [shape = 's32[1]{0}', space=sflag, size = 0x4, scoped, tag = 'scoped memory for tpu_custom_call.1']
  #allocation3 [shape = 's32[1]{0:T(128)S(6)}', space=smem, size = 0x200, scoped, tag = 'prefetched SMEM operand 0']
  %s0 = inlined_call_operand.<no memory space> [shape: s32[1], index: 0, kind: input, shape index: {}]
  %s1 = inlined_call_operand.vmem [shape: f32[8,32], index: 1, kind: input, shape index: {}]
  %s2 = inlined_call_operand.vmem [shape: f32[8,32], index: 2, kind: input, shape index: {}]
  %s3 = inlined_call_operand.vmem [shape: f32[32,64], index: 3, kind: input, shape index: {}]
  %s4 = inlined_call_operand.vmem [shape: f32[1,64], index: 4, kind: input, shape index: {}]
  %s5 = inlined_call_operand.vmem [shape: f32[3,64,16], index: 5, kind: input, shape index: {}]
  %s6 = inlined_call_operand.hbm [shape: f32[8,16], index: 6, kind: output, shape index: {}]
  %s7 = sld [smem:[#allocation0]]
  $region30: #{tpu_custom_call.1} parent=0
    _
  %s9 = ssub.s32 1, %s7
  %s10 = scalar_select 0, %s9, %s7
  %11 = sst [smem:[#allocation3]] %s0
  $region1: #{tpu_custom_call.1} parent=0
    #allocation4 [shape = 'u8[4096]{0}', space=vmem, size = 0x1000, scoped, tag = 'output window, operand 0, single buffered']
    #allocation5 [shape = 's32[1]{0}', space=sflag, size = 0x4, scoped, tag = 'scoped memory for tpu_custom_call.1']
    %12 = vsyncpa [#allocation5], 0
    // Predicated region
    $region2: #{tpu_custom_call.1} parent=1 // pred_check
      _
    $region3: #{tpu_custom_call.1} parent=1 // pred_check_branch
      %14 = sbr.rel (0) target = $region5
    $region4: #{tpu_custom_call.1} parent=1 // pred_region
      _
    $region5: #{tpu_custom_call.1} parent=1 // pred_fallthru
      _
    // Predicated region
    $region6: #{tpu_custom_call.1} parent=1 // pred_check
      _
    $region7: #{tpu_custom_call.1} parent=1 // pred_check_branch
      %16 = sbr.rel (0) target = $region9
    $region8: #{tpu_custom_call.1} parent=1 // pred_region
      _
    $region9: #{tpu_custom_call.1} parent=1 // pred_fallthru
      _
    // Predicated region
    $region10: #{tpu_custom_call.1} parent=1 // pred_check
      _
    $region11: #{tpu_custom_call.1} parent=1 // pred_check_branch
      %18 = sbr.rel (0) target = $region13
    $region12: #{tpu_custom_call.1} parent=1 // pred_region
      _
    $region13: #{tpu_custom_call.1} parent=1 // pred_fallthru
      _
    // Predicated region
    $region14: #{tpu_custom_call.1} parent=1 // pred_check
      _
    $region15: #{tpu_custom_call.1} parent=1 // pred_check_branch
      %20 = sbr.rel (0) target = $region17
    $region16: #{tpu_custom_call.1} parent=1 // pred_region
      _
    $region17: #{tpu_custom_call.1} parent=1 // pred_fallthru
      _
    // Predicated region
    $region18: #{tpu_custom_call.1} parent=1 // pred_check
      _
    $region19: #{tpu_custom_call.1} parent=1 // pred_check_branch
      %22 = sbr.rel (0) target = $region21
    $region20: #{tpu_custom_call.1} parent=1 // pred_region
      %s23 = sld [smem:[#allocation3]]
      %p24 = scmp.lt.s32.totalorder %s23, 2
      %s25 = scalar_select %p24, %s23, 2
      %s26 = smul.addr %s25, 8
      %s27 = smul.addr %s26, 8
      %s28 = scalar_lea.vmem %s5, %s27
      %s29 = sld [smem:[#allocation3]]
    $region21: #{tpu_custom_call.1} parent=1 // pred_fallthru
      _
    %s30 = sld [smem:[#allocation3]]
    %p31 = scmp.lt.s32.totalorder %s30, 2
    %s32 = scalar_select %p31, %s30, 2
    %s33 = smul.addr %s32, 8
    %s34 = smul.addr %s33, 8
    %s35 = scalar_lea.vmem %s5, %s34
    %s36 = sld [smem:[#allocation3]]
    %p37 = scmp.lt.s32.totalorder %s36, 2
    %s38 = scalar_select %p37, %s36, 2
    %s39 = smul.addr %s38, 8
    %s40 = smul.addr %s39, 8
    %s41 = scalar_lea.vmem %s5, %s40
    %s42 = sld [smem:[#allocation3]]
    %v43 = vld [vmem:[%s2] sm:$0xff]
    %v44 = vld [vmem:[%s1] sm:$0xff]
    %vm45 = vcmp.ge.f32.partialorder %v44, 0.1
    %v46 = vsel %vm45, %v43, 0.0
    %v47 = vld [vmem:[%s3] sm:$0xff]
    %v48 = vld [vmem:[%s3 + $0x8] sm:$0xff]
    %v49 = vld [vmem:[%s3 + $0x10] sm:$0xff]
    %v50 = vld [vmem:[%s3 + $0x18] sm:$0xff]
    %v51 = vld [vmem:[%s4] sm:$0x1]
    %v53 = vperm.slane %v51, 0
    %vm55 = vcmask 261120
    %v57 = vsel %vm55, %v46, 0
    %59 = vmatpush.msra.mxu0 0.0
    %60 = vmatpush.msra.mxu0 0.0
    %61 = vmatpush.msra.mxu0 0.0
    %62 = vmatpush.msra.mxu0 0.0
    %63 = vmatpush.msra.mxu0 0.0
    %64 = vmatpush.msra.mxu0 0.0
    %65 = vmatpush.msra.mxu0 0.0
    %66 = vmatpush.msra.mxu0 0.0
    %67 = vmatpush.msra.mxu0 0.0
    %68 = vmatpush.msra.mxu0 0.0
    %69 = vmatpush.msra.mxu0 0.0
    %70 = vmatpush.msra.mxu0 0.0
    %71 = vmatpush.msra.mxu0 %v50
    %72 = vmatpush.msra.mxu0 %v49
    %73 = vmatpush.msra.mxu0 %v48
    %74 = vmatpush.msra.mxu0 %v47
    %75 = vmatmul.f32.gmra.mxu0 %v57
    %v76 = vpop.f32.mrf.mxu0
    %v77 = vadd.f32 %v53, %v76
    %78 = vdwg.mxu0
    %v79 = vld [vmem:[%s41] sm:$0xff]
    %v80 = vld [vmem:[%s41 + $0x8] sm:$0xff]
    %v81 = vld [vmem:[%s41 + $0x10] sm:$0xff]
    %v82 = vld [vmem:[%s41 + $0x18] sm:$0xff]
    %v83 = vld [vmem:[%s41 + $0x20] sm:$0xff]
    %v84 = vld [vmem:[%s41 + $0x28] sm:$0xff]
    %v85 = vld [vmem:[%s41 + $0x30] sm:$0xff]
    %v86 = vld [vmem:[%s41 + $0x38] sm:$0xff]
    %vm87 = vcmask 523264
    %v89 = vsel %vm87, %v77, 0
    %91 = vmatpush.msra.mxu0 0.0
    %92 = vmatpush.msra.mxu0 0.0
    %93 = vmatpush.msra.mxu0 0.0
    %94 = vmatpush.msra.mxu0 0.0
    %95 = vmatpush.msra.mxu0 0.0
    %96 = vmatpush.msra.mxu0 0.0
    %97 = vmatpush.msra.mxu0 0.0
    %98 = vmatpush.msra.mxu0 0.0
    %99 = vmatpush.msra.mxu0 %v86
    %100 = vmatpush.msra.mxu0 %v85
    %101 = vmatpush.msra.mxu0 %v84
    %102 = vmatpush.msra.mxu0 %v83
    %103 = vmatpush.msra.mxu0 %v82
    %104 = vmatpush.msra.mxu0 %v81
    %105 = vmatpush.msra.mxu0 %v80
    %106 = vmatpush.msra.mxu0 %v79
    %107 = vmatmul.f32.gmra.mxu0 %v89
    %v108 = vpop.f32.mrf.mxu0
    %v109 = vadd.f32 0.0, %v108
    %110 = vdwg.mxu0
    %vm111 = vcmask 130048
    %112 = vst.msk [vmem:[#allocation4] sm:$0xff] %vm111, %v109
    // Predicated region
    $region22: #{tpu_custom_call.1} parent=1 // pred_check
      _
    $region23: #{tpu_custom_call.1} parent=1 // pred_check_branch
      %114 = sbr.rel (0) target = $region25
    $region24: #{tpu_custom_call.1} parent=1 // pred_region
      %116 = vsyncadd [#allocation5], 0
      %s118 = sshll.u32 [#allocation4], 4
      %s119 = int_to_ptr.vmem [resolvable:$true] %s118
      %s120 = sshll.u32 %s6, 4
      %s121 = int_to_ptr.hbm [resolvable:$true] %s120
      %123 = dma.vmem_to_hbm [thread:$0]  %s119, 128, %s121, [#allocation5]
    $region25: #{tpu_custom_call.1} parent=1 // pred_fallthru
      _
    // Predicated region
    $region26: #{tpu_custom_call.1} parent=1 // pred_check
      _
    $region27: #{tpu_custom_call.1} parent=1 // pred_check_branch
      %125 = sbr.rel (0) target = $region29
    $region28: #{tpu_custom_call.1} parent=1 // pred_region
      %127 = dma.done [#allocation5], 128
    $region29: #{tpu_custom_call.1} parent=1 // pred_fallthru
      _
    %128 = vsyncpa [#allocation5], 1

</llo_original>
